<compile_context>
chip_gen: v7x
topology: tpu7x:2x2x1
jax: 0.10.0
libtpu: 0.0.40
codegen_flags: <defaults>
</compile_context>

<pallas_src>
import jax
import jax.numpy as jnp
from jax.experimental import pallas as pl
from jax.experimental.pallas import tpu as pltpu

_VMEM_LIMIT = 48 * 1024 * 1024        # > v5e/v6e scoped defaults, < v7x 64 MiB physical
_VMEM_BUDGET = int(0.75 * _VMEM_LIMIT)  # leave headroom for weights / compiler scratch


# ----------------------------------------------------------------------------------
# Fused single-pass kernel: pool + FC + rescale for a block of `bn` samples.
# ----------------------------------------------------------------------------------
def _ca_fused_kernel(x_ref, w1t_ref, b1_ref, w2_ref, b2_ref, o_ref):
    # x: (bn, C, HW)   w1t: (C, mid)   b1: (1, mid)   w2: (C, mid)   b2: (C, 1)

    # Global average pool over spatial -> (bn, C, 1).  (Cast happens per-vreg after
    # the load; it does not add HBM traffic.)
    pooled = jnp.mean(x_ref[...].astype(jnp.float32), axis=-1, keepdims=True)

    # Squeeze-excite FC on VPU/XLU slots only (no MXU push/pop latency).
    # z[n, m] = relu(sum_c pooled[n, c] * w1[m, c] + b1[m])       -> (bn, 1, mid)
    z = jnp.sum(pooled * w1t_ref[...][None, :, :], axis=1, keepdims=True)
    z = jnp.maximum(z + b1_ref[...][None, :, :], 0.0)
    # y[n, c] = sigmoid(sum_m z[n, m] * w2[c, m] + b2[c])         -> (bn, C, 1)
    y = jnp.sum(z * w2_ref[...][None, :, :], axis=-1, keepdims=True)
    y = jax.nn.sigmoid(y + b2_ref[...][None, :, :])

    # Channel-wise rescale, broadcast over lanes.  Re-read x_ref (don't keep the big
    # tile live across the FC) and multiply in the streamed input dtype.
    o_ref[...] = x_ref[...] * y.astype(o_ref.dtype)


def _ca_fused(x, w1, b1, w2, b2, bn):
    N, C, H, W = x.shape
    HW = H * W
    mid = w1.shape[0]
    x3 = x.reshape(N, C, HW)
    out = pl.pallas_call(
        _ca_fused_kernel,
        out_shape=jax.ShapeDtypeStruct((N, C, HW), x.dtype),
        grid=(N // bn,),
        in_specs=[
            pl.BlockSpec((bn, C, HW), lambda i: (i, 0, 0)),
            pl.BlockSpec((C, mid), lambda i: (0, 0)),
            pl.BlockSpec((1, mid), lambda i: (0, 0)),
            pl.BlockSpec((C, mid), lambda i: (0, 0)),
            pl.BlockSpec((C, 1), lambda i: (0, 0)),
        ],
        out_specs=pl.BlockSpec((bn, C, HW), lambda i: (i, 0, 0)),
        compiler_params=pltpu.CompilerParams(
            dimension_semantics=("parallel",),
            vmem_limit_bytes=_VMEM_LIMIT),
    )(x3, w1.T, b1.reshape(1, mid), w2, b2.reshape(C, 1))
    return out.reshape(N, C, H, W)


# ----------------------------------------------------------------------------------
# Two-pass path for large images: tiled pool-sum reduction, tiny FC in JAX, tiled rescale.
# ----------------------------------------------------------------------------------
def _pool_sum_kernel(x_ref, o_ref):
    # Accumulate partial row sums across the HW grid axis (output-resident block).
    @pl.when(pl.program_id(1) == 0)
    def _():
        o_ref[...] = jnp.zeros_like(o_ref)
    o_ref[...] += jnp.sum(x_ref[...].astype(jnp.float32), axis=-1, keepdims=True)


def _rescale_kernel(x_ref, y_ref, o_ref):
    # Lean streamed rescale: 1 vld + 1 vmul + 1 vst per vreg (matters on v5e's single
    # store slot); multiply in the input dtype.
    o_ref[...] = x_ref[...] * y_ref[...].astype(o_ref.dtype)


def _choose_tile(dim, quantum, target):
    """Largest multiple of `quantum` that divides `dim` and is <= target, else full dim."""
    t = (min(target, dim) // quantum) * quantum
    while t >= quantum:
        if dim % t == 0:
            return t
        t -= quantum
    return dim


def _ca_two_pass(x, w1, b1, w2, b2):
    N, C, H, W = x.shape
    HW = H * W
    R = N * C
    x2 = x.reshape(R, HW)
    tr = _choose_tile(R, 8, 256)       # sublane-aligned row tile
    thw = _choose_tile(HW, 128, 2048)  # lane-dense spatial tile (multiple of 128 when possible)

    # Pass 1: pooled sums per (n, c) row, accumulated across HW tiles.
    sums = pl.pallas_call(
        _pool_sum_kernel,
        out_shape=jax.ShapeDtypeStruct((R, 1), jnp.float32),
        grid=(R // tr, HW // thw),
        in_specs=[pl.BlockSpec((tr, thw), lambda r, h: (r, h))],
        out_specs=pl.BlockSpec((tr, 1), lambda r, h: (r, 0)),
        compiler_params=pltpu.CompilerParams(
            dimension_semantics=("parallel", "arbitrary"),
            vmem_limit_bytes=_VMEM_LIMIT),
    )(x2)

    # Tiny squeeze-excite FC, hoisted out and batched over N (one (N,C)@(C,mid) matmul).
    pooled = sums.reshape(N, C) * (1.0 / HW)
    z = jnp.maximum(pooled @ w1.T + b1, 0.0)
    y = jax.nn.sigmoid(z @ w2.T + b2)                      # (N, C)
    y2 = y.reshape(R, 1)

    # Pass 2: tiled lane-dense rescale; both grid axes parallel (v7x: both TensorCores).
    out = pl.pallas_call(
        _rescale_kernel,
        out_shape=jax.ShapeDtypeStruct((R, HW), x.dtype),
        grid=(R // tr, HW // thw),
        in_specs=[pl.BlockSpec((tr, thw), lambda r, h: (r, h)),
                  pl.BlockSpec((tr, 1), lambda r, h: (r, 0))],
        out_specs=pl.BlockSpec((tr, thw), lambda r, h: (r, h)),
        compiler_params=pltpu.CompilerParams(
            dimension_semantics=("parallel", "parallel"),
            vmem_limit_bytes=_VMEM_LIMIT),
    )(x2, y2)
    return out.reshape(N, C, H, W)


# ----------------------------------------------------------------------------------
def ca_layer(x, w1, b1, w2, b2, *, force_two_pass=False):
    """x: (N, C, H, W).  w1: (mid, C), b1: (mid,), w2: (C, mid), b2: (C,)."""
    N, C, H, W = x.shape
    HW = H * W
    # Fused-path VMEM cost per sample: input + output tile, double-buffered.
    per_sample = 4 * C * HW * x.dtype.itemsize
    if force_two_pass or per_sample > _VMEM_BUDGET:
        # Fused (C, HW) tile would blow the VMEM budget (e.g. big images on v7x):
        # fall back to pool-reduce + hoisted FC + tiled rescale.
        return _ca_two_pass(x, w1, b1, w2, b2)
    # Small inputs: process as many samples per grid step as fit (fewer, larger steps).
    bn = N
    while N % bn or bn * per_sample > _VMEM_BUDGET:
        bn -= 1
    return _ca_fused(x, w1, b1, w2, b2, bn)


def ca_layer_ref(x, w1, b1, w2, b2):
    """Pure-JAX reference mirroring the PyTorch module."""
    pooled = jnp.mean(x, axis=(2, 3))                      # (N, C)
    z = jnp.maximum(pooled @ w1.T + b1, 0.0)               # (N, mid)
    y = jax.nn.sigmoid(z @ w2.T + b2)                      # (N, C)
    return x * y[:, :, None, None]


if __name__ == "__main__":
    # Module hyperparameters: channel=32, reduction=16 -> hidden = 2
    N, C, H, W = 2, 32, 8, 8
    reduction = 16
    mid = C // reduction

    key = jax.random.PRNGKey(0)
    kx, k1, k2, k3, k4 = jax.random.split(key, 5)

    x = jax.random.normal(kx, (N, C, H, W), dtype=jnp.float32)
    # Conv2d(C, C//r, 1) weight is (C//r, C, 1, 1) -> (C//r, C); bias (C//r,)
    w1 = jax.random.normal(k1, (mid, C), dtype=jnp.float32) * 0.1
    b1 = jax.random.normal(k2, (mid,), dtype=jnp.float32) * 0.1
    # Conv2d(C//r, C, 1) weight -> (C, C//r); bias (C,)
    w2 = jax.random.normal(k3, (C, mid), dtype=jnp.float32) * 0.1
    b2 = jax.random.normal(k4, (C,), dtype=jnp.float32) * 0.1

    ref = ca_layer_ref(x, w1, b1, w2, b2)

    # Default (fused, whole batch in one grid step at this size).
    out = jax.block_until_ready(ca_layer(x, w1, b1, w2, b2))
    assert out.shape == x.shape and out.dtype == x.dtype
    assert jnp.allclose(out, ref, atol=1e-5, rtol=1e-5), "fused path mismatch vs reference"

    # Large-input (VMEM-capped) path, forced here to verify it also runs clean.
    out2 = jax.block_until_ready(ca_layer(x, w1, b1, w2, b2, force_two_pass=True))
    assert jnp.allclose(out2, ref, atol=1e-5, rtol=1e-5), "two-pass path mismatch vs reference"

    print("KERNEL_OK")
</pallas_src>

<mosaic_0001>
module attributes {stable_mosaic.version = 11 : i64} {
  func.func @_ca_fused_kernel(%arg0: i32, %arg1: memref<2x32x64xf32, #tpu.memory_space<vmem>>, %arg2: memref<32x2xf32, #tpu.memory_space<vmem>>, %arg3: memref<1x2xf32, #tpu.memory_space<vmem>>, %arg4: memref<32x2xf32, #tpu.memory_space<vmem>>, %arg5: memref<32x1xf32, #tpu.memory_space<vmem>>, %arg6: memref<2x32x64xf32, #tpu.memory_space<vmem>>) attributes {dimension_semantics = [#tpu.dimension_semantics<parallel>], iteration_bounds = array<i64: 1>, scalar_prefetch = 0 : i64, scratch_operands = 0 : i64, tpu.core_type = #tpu.core_type<tc>, window_params = [{transform_indices = @transform_0, window_bounds = array<i64: 2, 32, 64>}, {pipeline_mode = #tpu.pipeline_mode<synchronous>, transform_indices = @transform_1, window_bounds = array<i64: 32, 2>}, {pipeline_mode = #tpu.pipeline_mode<synchronous>, transform_indices = @transform_2, window_bounds = array<i64: 1, 2>}, {pipeline_mode = #tpu.pipeline_mode<synchronous>, transform_indices = @transform_3, window_bounds = array<i64: 32, 2>}, {pipeline_mode = #tpu.pipeline_mode<synchronous>, transform_indices = @transform_4, window_bounds = array<i64: 32, 1>}, {transform_indices = @transform_5, window_bounds = array<i64: 2, 32, 64>}]} {
    %c0 = arith.constant 0 : index
    %c0_0 = arith.constant 0 : index
    %c0_1 = arith.constant 0 : index
    %0 = vector.load %arg1[%c0, %c0_0, %c0_1] : memref<2x32x64xf32, #tpu.memory_space<vmem>>, vector<2x32x64xf32>
    %cst = arith.constant dense<0.000000e+00> : vector<2x32xf32>
    %1 = vector.multi_reduction <add>, %0, %cst [2] : vector<2x32x64xf32> to vector<2x32xf32>
    %2 = vector.shape_cast %1 : vector<2x32xf32> to vector<2x32x1xf32>
    %cst_2 = arith.constant 6.400000e+01 : f32
    %3 = vector.broadcast %cst_2 : f32 to vector<2x32x1xf32>
    %4 = arith.divf %2, %3 : vector<2x32x1xf32>
    %c0_3 = arith.constant 0 : index
    %c0_4 = arith.constant 0 : index
    %5 = vector.load %arg2[%c0_3, %c0_4] : memref<32x2xf32, #tpu.memory_space<vmem>>, vector<32x2xf32>
    %6 = vector.shape_cast %5 : vector<32x2xf32> to vector<1x32x2xf32>
    %7 = vector.broadcast %4 : vector<2x32x1xf32> to vector<2x32x2xf32>
    %8 = vector.broadcast %6 : vector<1x32x2xf32> to vector<2x32x2xf32>
    %9 = arith.mulf %7, %8 : vector<2x32x2xf32>
    %cst_5 = arith.constant dense<0.000000e+00> : vector<2x2xf32>
    %10 = vector.multi_reduction <add>, %9, %cst_5 [1] : vector<2x32x2xf32> to vector<2x2xf32>
    %11 = vector.shape_cast %10 : vector<2x2xf32> to vector<2x1x2xf32>
    %c0_6 = arith.constant 0 : index
    %c0_7 = arith.constant 0 : index
    %12 = vector.load %arg3[%c0_6, %c0_7] : memref<1x2xf32, #tpu.memory_space<vmem>>, vector<1x2xf32>
    %13 = vector.shape_cast %12 : vector<1x2xf32> to vector<1x1x2xf32>
    %14 = vector.broadcast %13 : vector<1x1x2xf32> to vector<2x1x2xf32>
    %15 = arith.addf %11, %14 : vector<2x1x2xf32>
    %cst_8 = arith.constant 0.000000e+00 : f32
    %16 = vector.broadcast %cst_8 : f32 to vector<2x1x2xf32>
    %17 = arith.maximumf %15, %16 : vector<2x1x2xf32>
    %c0_9 = arith.constant 0 : index
    %c0_10 = arith.constant 0 : index
    %18 = vector.load %arg4[%c0_9, %c0_10] : memref<32x2xf32, #tpu.memory_space<vmem>>, vector<32x2xf32>
    %19 = vector.shape_cast %18 : vector<32x2xf32> to vector<1x32x2xf32>
    %20 = vector.broadcast %17 : vector<2x1x2xf32> to vector<2x32x2xf32>
    %21 = vector.broadcast %19 : vector<1x32x2xf32> to vector<2x32x2xf32>
    %22 = arith.mulf %20, %21 : vector<2x32x2xf32>
    %cst_11 = arith.constant dense<0.000000e+00> : vector<2x32xf32>
    %23 = vector.multi_reduction <add>, %22, %cst_11 [2] : vector<2x32x2xf32> to vector<2x32xf32>
    %24 = vector.shape_cast %23 : vector<2x32xf32> to vector<2x32x1xf32>
    %c0_12 = arith.constant 0 : index
    %c0_13 = arith.constant 0 : index
    %25 = vector.load %arg5[%c0_12, %c0_13] : memref<32x1xf32, #tpu.memory_space<vmem>>, vector<32x1xf32>
    %26 = vector.shape_cast %25 : vector<32x1xf32> to vector<1x32x1xf32>
    %27 = vector.broadcast %26 : vector<1x32x1xf32> to vector<2x32x1xf32>
    %28 = arith.addf %24, %27 : vector<2x32x1xf32>
    %29 = arith.negf %28 : vector<2x32x1xf32>
    %30 = math.exp %29 : vector<2x32x1xf32>
    %cst_14 = arith.constant 1.000000e+00 : f32
    %31 = vector.broadcast %cst_14 : f32 to vector<2x32x1xf32>
    %32 = arith.addf %31, %30 : vector<2x32x1xf32>
    %33 = arith.divf %31, %32 : vector<2x32x1xf32>
    %c0_15 = arith.constant 0 : index
    %c0_16 = arith.constant 0 : index
    %c0_17 = arith.constant 0 : index
    %34 = vector.load %arg1[%c0_15, %c0_16, %c0_17] : memref<2x32x64xf32, #tpu.memory_space<vmem>>, vector<2x32x64xf32>
    %35 = vector.broadcast %33 : vector<2x32x1xf32> to vector<2x32x64xf32>
    %36 = arith.mulf %34, %35 : vector<2x32x64xf32>
    %c0_18 = arith.constant 0 : index
    %c0_19 = arith.constant 0 : index
    %c0_20 = arith.constant 0 : index
    %37 = vector.load %arg6[%c0_18, %c0_19, %c0_20] : memref<2x32x64xf32, #tpu.memory_space<vmem>>, vector<2x32x64xf32>
    tpu.vector_store %arg6[%c0_18, %c0_19, %c0_20], %36 {strides = array<i32>} : memref<2x32x64xf32, #tpu.memory_space<vmem>>, vector<2x32x64xf32>,
    return
  }
  func.func @transform_0(%arg0: i32) -> (i32, i32, i32) {
    %c0_i32 = arith.constant 0 : i32
    %c0_i32_0 = arith.constant 0 : i32
    %c0_i32_1 = arith.constant 0 : i32
    return %arg0, %c0_i32, %c0_i32_0 : i32, i32, i32
  }
  func.func @transform_1(%arg0: i32) -> (i32, i32) {
    %c0_i32 = arith.constant 0 : i32
    %c0_i32_0 = arith.constant 0 : i32
    %c0_i32_1 = arith.constant 0 : i32
    return %c0_i32, %c0_i32_0 : i32, i32
  }
  func.func @transform_2(%arg0: i32) -> (i32, i32) {
    %c0_i32 = arith.constant 0 : i32
    %c0_i32_0 = arith.constant 0 : i32
    %c0_i32_1 = arith.constant 0 : i32
    return %c0_i32, %c0_i32_0 : i32, i32
  }
  func.func @transform_3(%arg0: i32) -> (i32, i32) {
    %c0_i32 = arith.constant 0 : i32
    %c0_i32_0 = arith.constant 0 : i32
    %c0_i32_1 = arith.constant 0 : i32
    return %c0_i32, %c0_i32_0 : i32, i32
  }
  func.func @transform_4(%arg0: i32) -> (i32, i32) {
    %c0_i32 = arith.constant 0 : i32
    %c0_i32_0 = arith.constant 0 : i32
    %c0_i32_1 = arith.constant 0 : i32
    return %c0_i32, %c0_i32_0 : i32, i32
  }
  func.func @transform_5(%arg0: i32) -> (i32, i32, i32) {
    %c0_i32 = arith.constant 0 : i32
    %c0_i32_0 = arith.constant 0 : i32
    %c0_i32_1 = arith.constant 0 : i32
    return %arg0, %c0_i32, %c0_i32_0 : i32, i32, i32
  }
}

</mosaic_0001>

<llo_original>
// kernel: tpu_custom_call.1
$region0: #{tpu_custom_call.1}
  #allocation0 [shape = 'u32[]', space=smem, size = 0x4, offset = 0x4, fixed_abs, tag = 'smem constant byte address 0x4 - core index']
  #allocation1 [shape = 'u32[144,128]{1,0:T(1,128)}', space=vmem, size = 0x12000, scoped, tag = 'internal scratch']
  %s0 = inlined_call_operand.vmem [shape: f32[2,32,64], index: 0, kind: input, shape index: {}]
  %s1 = inlined_call_operand.vmem [shape: f32[32,2], index: 1, kind: input, shape index: {}]
  %s2 = inlined_call_operand.vmem [shape: f32[1,2], index: 2, kind: input, shape index: {}]
  %s3 = inlined_call_operand.vmem [shape: f32[32,2], index: 3, kind: input, shape index: {}]
  %s4 = inlined_call_operand.vmem [shape: f32[32,1], index: 4, kind: input, shape index: {}]
  %s5 = inlined_call_operand.hbm [shape: f32[2,32,64], index: 5, kind: output, shape index: {}]
  %s6 = sld [smem:[#allocation0]]
  $region30: #{tpu_custom_call.1} parent=0
    _
  %s8 = ssub.s32 1, %s6
  %s9 = scalar_select 0, %s8, %s6
  $region1: #{tpu_custom_call.1} parent=0
    #allocation2 [shape = 'u8[32768]{0}', space=vmem, size = 0x8000, scoped, tag = 'output window, operand 0, single buffered']
    #allocation3 [shape = 's32[1]{0}', space=sflag, size = 0x4, scoped, tag = 'scoped memory for tpu_custom_call.1']
    %10 = vsyncpa [#allocation3], 0
    // Predicated region
    $region2: #{tpu_custom_call.1} parent=1 // pred_check
      _
    $region3: #{tpu_custom_call.1} parent=1 // pred_check_branch
      %12 = sbr.rel (0) target = $region5
    $region4: #{tpu_custom_call.1} parent=1 // pred_region
      _
    $region5: #{tpu_custom_call.1} parent=1 // pred_fallthru
      _
    // Predicated region
    $region6: #{tpu_custom_call.1} parent=1 // pred_check
      _
    $region7: #{tpu_custom_call.1} parent=1 // pred_check_branch
      %14 = sbr.rel (0) target = $region9
    $region8: #{tpu_custom_call.1} parent=1 // pred_region
      _
    $region9: #{tpu_custom_call.1} parent=1 // pred_fallthru
      _
    // Predicated region
    $region10: #{tpu_custom_call.1} parent=1 // pred_check
      _
    $region11: #{tpu_custom_call.1} parent=1 // pred_check_branch
      %16 = sbr.rel (0) target = $region13
    $region12: #{tpu_custom_call.1} parent=1 // pred_region
      _
    $region13: #{tpu_custom_call.1} parent=1 // pred_fallthru
      _
    // Predicated region
    $region14: #{tpu_custom_call.1} parent=1 // pred_check
      _
    $region15: #{tpu_custom_call.1} parent=1 // pred_check_branch
      %18 = sbr.rel (0) target = $region17
    $region16: #{tpu_custom_call.1} parent=1 // pred_region
      _
    $region17: #{tpu_custom_call.1} parent=1 // pred_fallthru
      _
    // Predicated region
    $region18: #{tpu_custom_call.1} parent=1 // pred_check
      _
    $region19: #{tpu_custom_call.1} parent=1 // pred_check_branch
      %20 = sbr.rel (0) target = $region21
    $region20: #{tpu_custom_call.1} parent=1 // pred_region
      _
    $region21: #{tpu_custom_call.1} parent=1 // pred_fallthru
      _
    %v21 = vld [vmem:[%s0] sm:$0xff]
    %v22 = vld [vmem:[%s0 + $0x8] sm:$0xff]
    %v23 = vld [vmem:[%s0 + $0x10] sm:$0xff]
    %v24 = vld [vmem:[%s0 + $0x18] sm:$0xff]
    %v25 = vld [vmem:[%s0 + $0x20] sm:$0xff]
    %v26 = vld [vmem:[%s0 + $0x28] sm:$0xff]
    %v27 = vld [vmem:[%s0 + $0x30] sm:$0xff]
    %v28 = vld [vmem:[%s0 + $0x38] sm:$0xff]
    %vm29 = vcmask 523264
    %v30 = vsel %vm29, %v21, 0.0
    %31 = vadd.xlane.f32.xlu0 %v30
    %v32 = vpop.xlane.xlu0 %31
    %v33 = vsel %vm29, %v22, 0.0
    %34 = vadd.xlane.f32.xlu0 %v33
    %v35 = vpop.xlane.xlu0 %34
    %v36 = vsel %vm29, %v23, 0.0
    %37 = vadd.xlane.f32.xlu0 %v36
    %v38 = vpop.xlane.xlu0 %37
    %v39 = vsel %vm29, %v24, 0.0
    %40 = vadd.xlane.f32.xlu0 %v39
    %v41 = vpop.xlane.xlu0 %40
    %v42 = vsel %vm29, %v25, 0.0
    %43 = vadd.xlane.f32.xlu0 %v42
    %v44 = vpop.xlane.xlu0 %43
    %v45 = vsel %vm29, %v26, 0.0
    %46 = vadd.xlane.f32.xlu0 %v45
    %v47 = vpop.xlane.xlu0 %46
    %v48 = vsel %vm29, %v27, 0.0
    %49 = vadd.xlane.f32.xlu0 %v48
    %v50 = vpop.xlane.xlu0 %49
    %v51 = vsel %vm29, %v28, 0.0
    %52 = vadd.xlane.f32.xlu0 %v51
    %v53 = vpop.xlane.xlu0 %52
    %v54 = vrcp.pop 64.0
    %v55 = vmul.f32 %v32, %v54
    %v56 = vmul.f32 %v35, %v54
    %v57 = vmul.f32 %v38, %v54
    %v58 = vmul.f32 %v41, %v54
    %v59 = vmul.f32 %v44, %v54
    %v60 = vmul.f32 %v47, %v54
    %v61 = vmul.f32 %v50, %v54
    %v62 = vmul.f32 %v53, %v54
    %v63 = vld [vmem:[%s1] sm:$0xff]
    %v64 = vld [vmem:[%s1 + $0x8] sm:$0xff]
    %v65 = vld [vmem:[%s1 + $0x10] sm:$0xff]
    %v66 = vld [vmem:[%s1 + $0x18] sm:$0xff]
    %v67 = vmul.f32 %v55, %v63
    %v68 = vmul.f32 %v56, %v64
    %v69 = vmul.f32 %v57, %v65
    %v70 = vmul.f32 %v58, %v66
    %v71 = vmul.f32 %v59, %v63
    %v72 = vmul.f32 %v60, %v64
    %v73 = vmul.f32 %v61, %v65
    %v74 = vmul.f32 %v62, %v66
    %vm75 = vcmask 15360
    %v76 = vsel %vm75, %v67, 0.0
    %v77 = vsel %vm75, %v68, 0.0
    %v78 = vadd.f32 %v76, %v77
    %v79 = vsel %vm75, %v69, 0.0
    %v80 = vadd.f32 %v78, %v79
    %v81 = vsel %vm75, %v70, 0.0
    %v82 = vadd.f32 %v80, %v81
    %v83 = vrot.slane %v82, 4
    %v84 = vadd.f32 %v82, %v83
    %v85 = vrot.slane %v84, 2
    %v86 = vadd.f32 %v84, %v85
    %v87 = vrot.slane %v86, 1
    %v88 = vadd.f32 %v86, %v87
    %v89 = vsel %vm75, %v71, 0.0
    %v90 = vsel %vm75, %v72, 0.0
    %v91 = vadd.f32 %v89, %v90
    %v92 = vsel %vm75, %v73, 0.0
    %v93 = vadd.f32 %v91, %v92
    %v94 = vsel %vm75, %v74, 0.0
    %v95 = vadd.f32 %v93, %v94
    %v96 = vrot.slane %v95, 4
    %v97 = vadd.f32 %v95, %v96
    %v98 = vrot.slane %v97, 2
    %v99 = vadd.f32 %v97, %v98
    %v100 = vrot.slane %v99, 1
    %v101 = vadd.f32 %v99, %v100
    %v102 = vld [vmem:[%s2] sm:$0x1]
    %v103 = vadd.f32 %v88, %v102
    %v104 = vadd.f32 %v101, %v102
    %v105 = vmax.f32 %v103, 0.0
    %v106 = vmax.f32 %v104, 0.0
    %v107 = vld [vmem:[%s3] sm:$0xff]
    %v108 = vld [vmem:[%s3 + $0x8] sm:$0xff]
    %v109 = vld [vmem:[%s3 + $0x10] sm:$0xff]
    %v110 = vld [vmem:[%s3 + $0x18] sm:$0xff]
    %v111 = vlaneseq
    %v112 = vshrl.u32 %v111, 7
    %v113 = vsub.s32 0, %v112
    %v114 = vrot.slane %v105, %v113
    %v115 = vlaneseq
    %v116 = vshrl.u32 %v115, 7
    %v117 = vsub.s32 0, %v116
    %v118 = vrot.slane %v106, %v117
    %v119 = vmul.f32 %v114, %v107
    %v120 = vmul.f32 %v114, %v108
    %v121 = vmul.f32 %v114, %v109
    %v122 = vmul.f32 %v114, %v110
    %v123 = vmul.f32 %v118, %v107
    %v124 = vmul.f32 %v118, %v108
    %v125 = vmul.f32 %v118, %v109
    %v126 = vmul.f32 %v118, %v110
    %v127 = vsel %vm75, %v119, 0.0
    %128 = vadd.xlane.f32.xlu0 %v127
    %v129 = vpop.xlane.xlu0 %128
    %v130 = vsel %vm75, %v120, 0.0
    %131 = vadd.xlane.f32.xlu0 %v130
    %v132 = vpop.xlane.xlu0 %131
    %v133 = vsel %vm75, %v121, 0.0
    %134 = vadd.xlane.f32.xlu0 %v133
    %v135 = vpop.xlane.xlu0 %134
    %v136 = vsel %vm75, %v122, 0.0
    %137 = vadd.xlane.f32.xlu0 %v136
    %v138 = vpop.xlane.xlu0 %137
    %v139 = vsel %vm75, %v123, 0.0
    %140 = vadd.xlane.f32.xlu0 %v139
    %v141 = vpop.xlane.xlu0 %140
    %v142 = vsel %vm75, %v124, 0.0
    %143 = vadd.xlane.f32.xlu0 %v142
    %v144 = vpop.xlane.xlu0 %143
    %v145 = vsel %vm75, %v125, 0.0
    %146 = vadd.xlane.f32.xlu0 %v145
    %v147 = vpop.xlane.xlu0 %146
    %v148 = vsel %vm75, %v126, 0.0
    %149 = vadd.xlane.f32.xlu0 %v148
    %v150 = vpop.xlane.xlu0 %149
    %v151 = vld [vmem:[%s4] sm:$0xff]
    %v152 = vld [vmem:[%s4 + $0x8] sm:$0xff]
    %v153 = vld [vmem:[%s4 + $0x10] sm:$0xff]
    %v154 = vld [vmem:[%s4 + $0x18] sm:$0xff]
    %v155 = vadd.f32 %v129, %v151
    %v156 = vadd.f32 %v132, %v152
    %v157 = vadd.f32 %v135, %v153
    %v158 = vadd.f32 %v138, %v154
    %v159 = vadd.f32 %v141, %v151
    %v160 = vadd.f32 %v144, %v152
    %v161 = vadd.f32 %v147, %v153
    %v162 = vadd.f32 %v150, %v154
    %v163 = vxor.u32 %v155, 2147483648
    %v164 = vxor.u32 %v156, 2147483648
    %v165 = vxor.u32 %v157, 2147483648
    %v166 = vxor.u32 %v158, 2147483648
    %v167 = vxor.u32 %v159, 2147483648
    %v168 = vxor.u32 %v160, 2147483648
    %v169 = vxor.u32 %v161, 2147483648
    %v170 = vxor.u32 %v162, 2147483648
    %v171 = vmul.f32 %v163, 1.442695
    %v172 = vpow.pop %v171
    %v173 = vmul.f32 %v164, 1.442695
    %v174 = vpow.pop %v173
    %v175 = vmul.f32 %v165, 1.442695
    %v176 = vpow.pop %v175
    %v177 = vmul.f32 %v166, 1.442695
    %v178 = vpow.pop %v177
    %v179 = vmul.f32 %v167, 1.442695
    %v180 = vpow.pop %v179
    %v181 = vmul.f32 %v168, 1.442695
    %v182 = vpow.pop %v181
    %v183 = vmul.f32 %v169, 1.442695
    %v184 = vpow.pop %v183
    %v185 = vmul.f32 %v170, 1.442695
    %v186 = vpow.pop %v185
    %v187 = vadd.f32 %v172, 1.0
    %v188 = vadd.f32 %v174, 1.0
    %v189 = vadd.f32 %v176, 1.0
    %v190 = vadd.f32 %v178, 1.0
    %v191 = vadd.f32 %v180, 1.0
    %v192 = vadd.f32 %v182, 1.0
    %v193 = vadd.f32 %v184, 1.0
    %v194 = vadd.f32 %v186, 1.0
    %v195 = vrcp.pop %v187
    %v196 = vmul.f32 1.0, %v195
    %v197 = vrcp.pop %v188
    %v198 = vmul.f32 1.0, %v197
    %v199 = vrcp.pop %v189
    %v200 = vmul.f32 1.0, %v199
    %v201 = vrcp.pop %v190
    %v202 = vmul.f32 1.0, %v201
    %v203 = vrcp.pop %v191
    %v204 = vmul.f32 1.0, %v203
    %v205 = vrcp.pop %v192
    %v206 = vmul.f32 1.0, %v205
    %v207 = vrcp.pop %v193
    %v208 = vmul.f32 1.0, %v207
    %v209 = vrcp.pop %v194
    %v210 = vmul.f32 1.0, %v209
    %212 = vset.pattern.permute.xlu0 0
    %213 = vperm.xlu0 %212, %v196
    %v214 = vpop.permute.xlu0 %213
    %217 = vset.pattern.permute.xlu0 0
    %218 = vperm.xlu0 %217, %v198
    %v219 = vpop.permute.xlu0 %218
    %222 = vset.pattern.permute.xlu0 0
    %223 = vperm.xlu0 %222, %v200
    %v224 = vpop.permute.xlu0 %223
    %227 = vset.pattern.permute.xlu0 0
    %228 = vperm.xlu0 %227, %v202
    %v229 = vpop.permute.xlu0 %228
    %232 = vset.pattern.permute.xlu0 0
    %233 = vperm.xlu0 %232, %v204
    %v234 = vpop.permute.xlu0 %233
    %237 = vset.pattern.permute.xlu0 0
    %238 = vperm.xlu0 %237, %v206
    %v239 = vpop.permute.xlu0 %238
    %242 = vset.pattern.permute.xlu0 0
    %243 = vperm.xlu0 %242, %v208
    %v244 = vpop.permute.xlu0 %243
    %247 = vset.pattern.permute.xlu0 0
    %248 = vperm.xlu0 %247, %v210
    %v249 = vpop.permute.xlu0 %248
    %v251 = vmul.f32 %v21, %v214
    %v252 = vmul.f32 %v22, %v219
    %v253 = vmul.f32 %v23, %v224
    %v254 = vmul.f32 %v24, %v229
    %v255 = vmul.f32 %v25, %v234
    %v256 = vmul.f32 %v26, %v239
    %v257 = vmul.f32 %v27, %v244
    %v258 = vmul.f32 %v28, %v249
    %259 = vst.msk [vmem:[#allocation2] sm:$0xff] %vm29, %v251
    %260 = vst.msk [vmem:[#allocation2 + $0x8] sm:$0xff] %vm29, %v252
    %261 = vst.msk [vmem:[#allocation2 + $0x10] sm:$0xff] %vm29, %v253
    %262 = vst.msk [vmem:[#allocation2 + $0x18] sm:$0xff] %vm29, %v254
    %263 = vst.msk [vmem:[#allocation2 + $0x20] sm:$0xff] %vm29, %v255
    %264 = vst.msk [vmem:[#allocation2 + $0x28] sm:$0xff] %vm29, %v256
    %265 = vst.msk [vmem:[#allocation2 + $0x30] sm:$0xff] %vm29, %v257
    %266 = vst.msk [vmem:[#allocation2 + $0x38] sm:$0xff] %vm29, %v258
    // Predicated region
    $region22: #{tpu_custom_call.1} parent=1 // pred_check
      _
    $region23: #{tpu_custom_call.1} parent=1 // pred_check_branch
      %268 = sbr.rel (0) target = $region25
    $region24: #{tpu_custom_call.1} parent=1 // pred_region
      %s270 = ssub.s32 1024, 1024
      %271 = vsyncadd [#allocation3], %s270
      %s272 = sshll.u32 [#allocation2], 4
      %s273 = int_to_ptr.vmem [resolvable:$true] %s272
      %278 = dma.vmem_to_hbm [thread:$0]  %s273, 1024, %s5, [#allocation3], 128, 128, 8
    $region25: #{tpu_custom_call.1} parent=1 // pred_fallthru
      _
    // Predicated region
    $region26: #{tpu_custom_call.1} parent=1 // pred_check
      _
    $region27: #{tpu_custom_call.1} parent=1 // pred_check_branch
      %280 = sbr.rel (0) target = $region29
    $region28: #{tpu_custom_call.1} parent=1 // pred_region
      %281 = dma.done [#allocation3], 1024
    $region29: #{tpu_custom_call.1} parent=1 // pred_fallthru
      _
    %282 = vsyncpa [#allocation3], 1

</llo_original>
